<compile_context>
chip_gen: v7x
topology: tpu7x:2x2x1
jax: 0.10.0
libtpu: 0.0.40
codegen_flags: <defaults>
</compile_context>

<pallas_src>
import math
import numpy as np
import jax
import jax.numpy as jnp
from jax.experimental import pallas as pl
from jax.experimental.pallas import tpu as pltpu


_FALLBACK_VMEM_BYTES = 64 * 1024 * 1024      # v7x per-TensorCore (smallest of v5e/v6e/v7x)


def _vmem_capacity_bytes():
    try:
        return int(pltpu.get_tpu_info().vmem_capacity_bytes)
    except Exception:
        return _FALLBACK_VMEM_BYTES


def _plan_tiles(B, M, N, D, n_sub, in_bytes, out_bytes, budget_bytes):
    """Pick (tB, tK, tN): full extent when the dim is small, else 256/512-class tiles
    shrunk (K first, then B, then N, keeping the lane-dense output tile last) until the
    double-buffered VMEM estimate fits the per-generation budget."""
    tB = B if B <= 256 else 256
    tK = M if M <= 512 else 512
    tN = N if N <= 512 else 512

    def est(tb, tk, tn):
        return (2 * D * tb * tk * in_bytes          # x blocks (double-buffered)
                + 2 * n_sub * tk * tn * in_bytes    # unreplicated per-grade weight blocks
                + 2 * tn * 4                        # bias
                + 2 * D * tb * tn * out_bytes       # output blocks
                + D * tb * tn * 4)                  # f32 accumulator scratch

    while est(tB, tK, tN) > budget_bytes:
        if tK > 128:
            tK = max(128, (tK // 2) // 128 * 128)
        elif tB > 8:
            tB = max(8, (tB // 2) // 8 * 8)
        elif tN > 128:
            tN = max(128, (tN // 2) // 128 * 128)
        else:
            break          # smallest legal tiles; let the compiler handle the remainder
    return tB, tK, tN


def _make_mvlinear_kernel(sizes, tB, tN):
    """sizes: static tuple of per-grade blade counts (blades are grade-contiguous)."""

    def kernel(x_ref, w_ref, b_ref, o_ref, acc_ref):
        # x_ref  : (D, tB, tK)        blade-major input tile
        # w_ref  : (n_sub, tK, tN)    unreplicated per-grade weights
        # b_ref  : (1, tN)            bias (scalar blade only), f32
        # o_ref  : (D, tB, tN)
        # acc_ref: (D, tB, tN) f32    accumulator across the K grid axis
        k = pl.program_id(2)
        tK = x_ref.shape[-1]

        @pl.when(k == 0)
        def _init():
            acc_ref[...] = jnp.zeros_like(acc_ref)
            # Bias lives only on the scalar (grade-0) blade: fold it into the init so the
            # finalize store is a single unconditional path.
            acc_ref[0, :, :] = jnp.broadcast_to(b_ref[...], (tB, tN)).astype(jnp.float32)

        # One matmul per grade, batching all of that grade's blades into the LHS rows.
        # Grade offsets/sizes are compile-time constants -> static slices, zero cost.
        off = 0
        for g, sz in enumerate(sizes):
            xg = x_ref[off:off + sz].reshape(sz * tB, tK)
            yg = jnp.dot(xg, w_ref[g], preferred_element_type=jnp.float32)
            acc_ref[off:off + sz] += yg.reshape(sz, tB, tN)
            off += sz

        @pl.when(k == pl.num_programs(2) - 1)
        def _finalize():
            o_ref[...] = acc_ref[...].astype(o_ref.dtype)

    return kernel


def mvlinear_forward(x, weight, bias, subspace_sizes, *, compute_dtype=jnp.bfloat16):
    """x: (B, M, D); weight: (N, M, n_subspaces); bias: (N,)/(1,N,1)/None -> (B, N, D).

    compute_dtype: dtype of the MXU operands (accumulation is always f32).  bf16 is the
    native MXU rate on all generations; pass jnp.float32 for an exact path.
    """
    B, M, D = x.shape
    N = weight.shape[0]
    sizes = tuple(int(s) for s in subspace_sizes)
    n_sub = len(sizes)
    assert sum(sizes) == D and weight.shape == (N, M, n_sub)

    out_dtype = x.dtype
    in_bytes = jnp.dtype(compute_dtype).itemsize
    out_bytes = jnp.dtype(out_dtype).itemsize

    capacity = _vmem_capacity_bytes()
    budget = int(0.70 * capacity)                       # leave headroom for internal scratch
    tB, tK, tN = _plan_tiles(B, M, N, D, n_sub, in_bytes, out_bytes, budget)
    B_pad = -(-B // tB) * tB
    M_pad = -(-M // tK) * tK
    N_pad = -(-N // tN) * tN

    # Layout prep.  In a real model: transpose the weight once at parameter init and keep
    # activations blade-major across layers so both activation transposes (narrow-D last
    # dim -> masked partial stores + an extra HBM pass each) disappear.  Kept here only to
    # honor the module's (B, M, D) -> (B, N, D) contract.
    x_t = jnp.transpose(x, (2, 0, 1)).astype(compute_dtype)          # (D, B, M)
    w_t = jnp.transpose(weight, (2, 1, 0)).astype(compute_dtype)     # (n_sub, M, N)
    if bias is None:
        b_vec = jnp.zeros((N,), jnp.float32)
    else:
        b_vec = jnp.reshape(bias, (-1,)).astype(jnp.float32)         # accepts (N,) or (1,N,1)
    b2 = b_vec.reshape(1, N)

    if (B_pad, M_pad, N_pad) != (B, M, N):
        x_t = jnp.pad(x_t, ((0, 0), (0, B_pad - B), (0, M_pad - M)))
        w_t = jnp.pad(w_t, ((0, 0), (0, M_pad - M), (0, N_pad - N)))
        b2 = jnp.pad(b2, ((0, 0), (0, N_pad - N)))

    grid = (B_pad // tB, N_pad // tN, M_pad // tK)
    kernel = _make_mvlinear_kernel(sizes, tB, tN)

    out_t = pl.pallas_call(
        kernel,
        out_shape=jax.ShapeDtypeStruct((D, B_pad, N_pad), out_dtype),
        grid=grid,
        in_specs=[
            # x: all D blades of the current (batch, K) tile, blade-major, lane-dense in M.
            pl.BlockSpec((D, tB, tK), lambda b, n, k: (0, b, k)),
            # weight: all grades, UNreplicated; the kernel picks the grade statically.
            pl.BlockSpec((n_sub, tK, tN), lambda b, n, k: (0, k, n)),
            # bias: same (1, tN) block for every batch / K tile.
            pl.BlockSpec((1, tN), lambda b, n, k: (0, n)),
        ],
        out_specs=pl.BlockSpec((D, tB, tN), lambda b, n, k: (0, b, n)),
        scratch_shapes=[pltpu.VMEM((D, tB, tN), jnp.float32)],
        compiler_params=pltpu.CompilerParams(
            # b / n tiles are independent -> shardable across v7x's two TensorCores;
            # the K axis carries the accumulator and must stay "arbitrary".
            dimension_semantics=("parallel", "parallel", "arbitrary"),
            vmem_limit_bytes=int(0.8 * capacity),
        ),
    )(x_t, w_t, b2)

    out_t = out_t[:, :B, :N]
    return jnp.transpose(out_t, (1, 2, 0))                           # (B, N, D)


if __name__ == "__main__":
    # Clifford algebra of dimension d=3: 2^3 = 8 blades, grade sizes (1, 3, 3, 1).
    subspace_sizes = (1, 3, 3, 1)
    n_subspaces = len(subspace_sizes)
    D = int(sum(subspace_sizes))

    B = 2    # batch
    M = 4    # in_features
    N = 8    # out_features

    key = jax.random.PRNGKey(0)
    kx, kw, kb = jax.random.split(key, 3)

    # Parameter init mirroring reset_parameters(): weight ~ Normal(0, 1/sqrt(in_features)).
    # (A nonzero bias is used here so the scalar-blade bias path is actually exercised.)
    weight = (1.0 / math.sqrt(M)) * jax.random.normal(
        kw, (N, M, n_subspaces), dtype=jnp.float32)
    bias = 0.1 * jax.random.normal(kb, (N,), dtype=jnp.float32)
    x = jax.random.normal(kx, (B, M, D), dtype=jnp.float32)

    # Plain-JAX reference (same math as the torch module).
    sizes_np = np.asarray(subspace_sizes)
    w_rep = jnp.repeat(weight, sizes_np, axis=-1)                     # (N, M, D)
    bias_embed = jnp.zeros((1, N, D), jnp.float32).at[:, :, 0].set(bias)
    ref_f32 = jnp.einsum('bmi,nmi->bni', x, w_rep) + bias_embed

    # Reference with bf16-quantized operands (exact products, f32 accumulation) for an
    # apples-to-apples check of the default bf16 compute path.
    x_q = x.astype(jnp.bfloat16).astype(jnp.float32)
    w_q = w_rep.astype(jnp.bfloat16).astype(jnp.float32)
    ref_bf16 = jnp.einsum('bmi,nmi->bni', x_q, w_q) + bias_embed

    # 1) Exact f32 path: validates the kernel structure (grade batching, K-tiling, bias).
    out_f32 = jax.block_until_ready(
        mvlinear_forward(x, weight, bias, subspace_sizes, compute_dtype=jnp.float32))
    assert out_f32.shape == (B, N, D)
    np.testing.assert_allclose(np.asarray(out_f32), np.asarray(ref_f32),
                               rtol=1e-5, atol=1e-5)

    # 2) Default bf16-operand path (MXU-native throughput, f32 accumulation).
    out = jax.block_until_ready(mvlinear_forward(x, weight, bias, subspace_sizes))
    assert out.shape == (B, N, D)
    np.testing.assert_allclose(np.asarray(out), np.asarray(ref_bf16),
                               rtol=1e-3, atol=1e-3)
    np.testing.assert_allclose(np.asarray(out), np.asarray(ref_f32),
                               rtol=3e-2, atol=3e-2)

    print("KERNEL_OK")
</pallas_src>

<mosaic_0001>
module attributes {stable_mosaic.version = 11 : i64} {
  func.func @kernel(%arg0: i32, %arg1: i32, %arg2: i32, %arg3: memref<8x2x4xf32, #tpu.memory_space<vmem>>, %arg4: memref<4x4x8xf32, #tpu.memory_space<vmem>>, %arg5: memref<1x8xf32, #tpu.memory_space<vmem>>, %arg6: memref<8x2x8xf32, #tpu.memory_space<vmem>>, %arg7: memref<8x2x8xf32, #tpu.memory_space<vmem>>) attributes {dimension_semantics = [#tpu.dimension_semantics<parallel>, #tpu.dimension_semantics<parallel>, #tpu.dimension_semantics<arbitrary>], iteration_bounds = array<i64: 1, 1, 1>, scalar_prefetch = 0 : i64, scratch_operands = 1 : i64, tpu.core_type = #tpu.core_type<tc>, window_params = [{transform_indices = @transform_0, window_bounds = array<i64: 8, 2, 4>}, {transform_indices = @transform_1, window_bounds = array<i64: 4, 4, 8>}, {transform_indices = @transform_2, window_bounds = array<i64: 1, 8>}, {transform_indices = @transform_3, window_bounds = array<i64: 8, 2, 8>}]} {
    %c0_i32 = arith.constant 0 : i32
    %0 = arith.cmpi eq, %arg2, %c0_i32 : i32
    %1 = arith.extui %0 : i1 to i32
    %c0_i32_0 = arith.constant 0 : i32
    %2 = arith.cmpi ne, %1, %c0_i32_0 : i32
    scf.if %2 {
      %cst_48 = arith.constant 0.000000e+00 : f32
      %42 = vector.broadcast %cst_48 : f32 to vector<8x2x8xf32>
      %c0_49 = arith.constant 0 : index
      %c0_50 = arith.constant 0 : index
      %c0_51 = arith.constant 0 : index
      %43 = vector.load %arg7[%c0_49, %c0_50, %c0_51] : memref<8x2x8xf32, #tpu.memory_space<vmem>>, vector<8x2x8xf32>
      tpu.vector_store %arg7[%c0_49, %c0_50, %c0_51], %42 {strides = array<i32>} : memref<8x2x8xf32, #tpu.memory_space<vmem>>, vector<8x2x8xf32>,
      %c0_52 = arith.constant 0 : index
      %c0_53 = arith.constant 0 : index
      %44 = vector.load %arg5[%c0_52, %c0_53] : memref<1x8xf32, #tpu.memory_space<vmem>>, vector<1x8xf32>
      %45 = vector.shape_cast %44 : vector<1x8xf32> to vector<1x8xf32>
      %46 = vector.broadcast %45 : vector<1x8xf32> to vector<2x8xf32>
      %c0_54 = arith.constant 0 : index
      %c0_55 = arith.constant 0 : index
      %c0_56 = arith.constant 0 : index
      %47 = vector.load %arg7[%c0_54, %c0_55, %c0_56] : memref<8x2x8xf32, #tpu.memory_space<vmem>>, vector<1x2x8xf32>
      %48 = vector.shape_cast %47 : vector<1x2x8xf32> to vector<2x8xf32>
      %49 = vector.shape_cast %46 : vector<2x8xf32> to vector<1x2x8xf32>
      tpu.vector_store %arg7[%c0_54, %c0_55, %c0_56], %49 {strides = array<i32>} : memref<8x2x8xf32, #tpu.memory_space<vmem>>, vector<1x2x8xf32>,
    } else {
    }
    %c0 = arith.constant 0 : index
    %c0_1 = arith.constant 0 : index
    %c0_2 = arith.constant 0 : index
    %3 = vector.load %arg3[%c0, %c0_1, %c0_2] : memref<8x2x4xf32, #tpu.memory_space<vmem>>, vector<1x2x4xf32>
    %4 = vector.shape_cast %3 : vector<1x2x4xf32> to vector<2x4xf32>
    %c0_3 = arith.constant 0 : index
    %c0_4 = arith.constant 0 : index
    %c0_5 = arith.constant 0 : index
    %5 = vector.load %arg4[%c0_3, %c0_4, %c0_5] : memref<4x4x8xf32, #tpu.memory_space<vmem>>, vector<1x4x8xf32>
    %6 = vector.shape_cast %5 : vector<1x4x8xf32> to vector<4x8xf32>
    %cst = arith.constant dense<0.000000e+00> : vector<2x8xf32>
    %7 = tpu.matmul %4, %6, %cst {dimension_numbers = #tpu.dot_dimension_numbers<[1], [0], [0], [1], [0, 0, 1, 1], [], []>} : vector<2x4xf32>, vector<4x8xf32>, vector<2x8xf32> -> vector<2x8xf32>
    %c0_6 = arith.constant 0 : index
    %c0_7 = arith.constant 0 : index
    %c0_8 = arith.constant 0 : index
    %8 = vector.load %arg7[%c0_6, %c0_7, %c0_8] : memref<8x2x8xf32, #tpu.memory_space<vmem>>, vector<1x2x8xf32>
    %9 = vector.shape_cast %7 : vector<2x8xf32> to vector<1x2x8xf32>
    %10 = arith.addf %8, %9 : vector<1x2x8xf32>
    %c0_9 = arith.constant 0 : index
    %c0_10 = arith.constant 0 : index
    %c0_11 = arith.constant 0 : index
    %11 = vector.load %arg7[%c0_9, %c0_10, %c0_11] : memref<8x2x8xf32, #tpu.memory_space<vmem>>, vector<1x2x8xf32>
    tpu.vector_store %arg7[%c0_9, %c0_10, %c0_11], %10 {strides = array<i32>} : memref<8x2x8xf32, #tpu.memory_space<vmem>>, vector<1x2x8xf32>,
    %c1 = arith.constant 1 : index
    %c0_12 = arith.constant 0 : index
    %c0_13 = arith.constant 0 : index
    %12 = vector.load %arg3[%c1, %c0_12, %c0_13] : memref<8x2x4xf32, #tpu.memory_space<vmem>>, vector<3x2x4xf32>
    %13 = vector.shape_cast %12 : vector<3x2x4xf32> to vector<6x4xf32>
    %c1_14 = arith.constant 1 : index
    %c0_15 = arith.constant 0 : index
    %c0_16 = arith.constant 0 : index
    %14 = vector.load %arg4[%c1_14, %c0_15, %c0_16] : memref<4x4x8xf32, #tpu.memory_space<vmem>>, vector<1x4x8xf32>
    %15 = vector.shape_cast %14 : vector<1x4x8xf32> to vector<4x8xf32>
    %cst_17 = arith.constant dense<0.000000e+00> : vector<6x8xf32>
    %16 = tpu.matmul %13, %15, %cst_17 {dimension_numbers = #tpu.dot_dimension_numbers<[1], [0], [0], [1], [0, 0, 1, 1], [], []>} : vector<6x4xf32>, vector<4x8xf32>, vector<6x8xf32> -> vector<6x8xf32>
    %c1_18 = arith.constant 1 : index
    %c0_19 = arith.constant 0 : index
    %c0_20 = arith.constant 0 : index
    %17 = vector.load %arg7[%c1_18, %c0_19, %c0_20] : memref<8x2x8xf32, #tpu.memory_space<vmem>>, vector<3x2x8xf32>
    %18 = vector.shape_cast %16 : vector<6x8xf32> to vector<3x2x8xf32>
    %19 = arith.addf %17, %18 : vector<3x2x8xf32>
    %c1_21 = arith.constant 1 : index
    %c0_22 = arith.constant 0 : index
    %c0_23 = arith.constant 0 : index
    %20 = vector.load %arg7[%c1_21, %c0_22, %c0_23] : memref<8x2x8xf32, #tpu.memory_space<vmem>>, vector<3x2x8xf32>
    tpu.vector_store %arg7[%c1_21, %c0_22, %c0_23], %19 {strides = array<i32>} : memref<8x2x8xf32, #tpu.memory_space<vmem>>, vector<3x2x8xf32>,
    %c4 = arith.constant 4 : index
    %c0_24 = arith.constant 0 : index
    %c0_25 = arith.constant 0 : index
    %21 = vector.load %arg3[%c4, %c0_24, %c0_25] : memref<8x2x4xf32, #tpu.memory_space<vmem>>, vector<3x2x4xf32>
    %22 = vector.shape_cast %21 : vector<3x2x4xf32> to vector<6x4xf32>
    %c2 = arith.constant 2 : index
    %c0_26 = arith.constant 0 : index
    %c0_27 = arith.constant 0 : index
    %23 = vector.load %arg4[%c2, %c0_26, %c0_27] : memref<4x4x8xf32, #tpu.memory_space<vmem>>, vector<1x4x8xf32>
    %24 = vector.shape_cast %23 : vector<1x4x8xf32> to vector<4x8xf32>
    %cst_28 = arith.constant dense<0.000000e+00> : vector<6x8xf32>
    %25 = tpu.matmul %22, %24, %cst_28 {dimension_numbers = #tpu.dot_dimension_numbers<[1], [0], [0], [1], [0, 0, 1, 1], [], []>} : vector<6x4xf32>, vector<4x8xf32>, vector<6x8xf32> -> vector<6x8xf32>
    %c4_29 = arith.constant 4 : index
    %c0_30 = arith.constant 0 : index
    %c0_31 = arith.constant 0 : index
    %26 = vector.load %arg7[%c4_29, %c0_30, %c0_31] : memref<8x2x8xf32, #tpu.memory_space<vmem>>, vector<3x2x8xf32>
    %27 = vector.shape_cast %25 : vector<6x8xf32> to vector<3x2x8xf32>
    %28 = arith.addf %26, %27 : vector<3x2x8xf32>
    %c4_32 = arith.constant 4 : index
    %c0_33 = arith.constant 0 : index
    %c0_34 = arith.constant 0 : index
    %29 = vector.load %arg7[%c4_32, %c0_33, %c0_34] : memref<8x2x8xf32, #tpu.memory_space<vmem>>, vector<3x2x8xf32>
    tpu.vector_store %arg7[%c4_32, %c0_33, %c0_34], %28 {strides = array<i32>} : memref<8x2x8xf32, #tpu.memory_space<vmem>>, vector<3x2x8xf32>,
    %c7 = arith.constant 7 : index
    %c0_35 = arith.constant 0 : index
    %c0_36 = arith.constant 0 : index
    %30 = vector.load %arg3[%c7, %c0_35, %c0_36] : memref<8x2x4xf32, #tpu.memory_space<vmem>>, vector<1x2x4xf32>
    %31 = vector.shape_cast %30 : vector<1x2x4xf32> to vector<2x4xf32>
    %c3 = arith.constant 3 : index
    %c0_37 = arith.constant 0 : index
    %c0_38 = arith.constant 0 : index
    %32 = vector.load %arg4[%c3, %c0_37, %c0_38] : memref<4x4x8xf32, #tpu.memory_space<vmem>>, vector<1x4x8xf32>
    %33 = vector.shape_cast %32 : vector<1x4x8xf32> to vector<4x8xf32>
    %cst_39 = arith.constant dense<0.000000e+00> : vector<2x8xf32>
    %34 = tpu.matmul %31, %33, %cst_39 {dimension_numbers = #tpu.dot_dimension_numbers<[1], [0], [0], [1], [0, 0, 1, 1], [], []>} : vector<2x4xf32>, vector<4x8xf32>, vector<2x8xf32> -> vector<2x8xf32>
    %c7_40 = arith.constant 7 : index
    %c0_41 = arith.constant 0 : index
    %c0_42 = arith.constant 0 : index
    %35 = vector.load %arg7[%c7_40, %c0_41, %c0_42] : memref<8x2x8xf32, #tpu.memory_space<vmem>>, vector<1x2x8xf32>
    %36 = vector.shape_cast %34 : vector<2x8xf32> to vector<1x2x8xf32>
    %37 = arith.addf %35, %36 : vector<1x2x8xf32>
    %c7_43 = arith.constant 7 : index
    %c0_44 = arith.constant 0 : index
    %c0_45 = arith.constant 0 : index
    %38 = vector.load %arg7[%c7_43, %c0_44, %c0_45] : memref<8x2x8xf32, #tpu.memory_space<vmem>>, vector<1x2x8xf32>
    tpu.vector_store %arg7[%c7_43, %c0_44, %c0_45], %37 {strides = array<i32>} : memref<8x2x8xf32, #tpu.memory_space<vmem>>, vector<1x2x8xf32>,
    %c0_i32_46 = arith.constant 0 : i32
    %39 = arith.cmpi eq, %arg2, %c0_i32_46 : i32
    %40 = arith.extui %39 : i1 to i32
    %c0_i32_47 = arith.constant 0 : i32
    %41 = arith.cmpi ne, %40, %c0_i32_47 : i32
    scf.if %41 {
      %c0_48 = arith.constant 0 : index
      %c0_49 = arith.constant 0 : index
      %c0_50 = arith.constant 0 : index
      %42 = vector.load %arg7[%c0_48, %c0_49, %c0_50] : memref<8x2x8xf32, #tpu.memory_space<vmem>>, vector<8x2x8xf32>
      %c0_51 = arith.constant 0 : index
      %c0_52 = arith.constant 0 : index
      %c0_53 = arith.constant 0 : index
      %43 = vector.load %arg6[%c0_51, %c0_52, %c0_53] : memref<8x2x8xf32, #tpu.memory_space<vmem>>, vector<8x2x8xf32>
      tpu.vector_store %arg6[%c0_51, %c0_52, %c0_53], %42 {strides = array<i32>} : memref<8x2x8xf32, #tpu.memory_space<vmem>>, vector<8x2x8xf32>,
    } else {
    }
    return
  }
  func.func @transform_0(%arg0: i32, %arg1: i32, %arg2: i32) -> (i32, i32, i32) {
    %c0_i32 = arith.constant 0 : i32
    %c0_i32_0 = arith.constant 0 : i32
    return %c0_i32, %arg0, %arg2 : i32, i32, i32
  }
  func.func @transform_1(%arg0: i32, %arg1: i32, %arg2: i32) -> (i32, i32, i32) {
    %c0_i32 = arith.constant 0 : i32
    %c0_i32_0 = arith.constant 0 : i32
    return %c0_i32, %arg2, %arg1 : i32, i32, i32
  }
  func.func @transform_2(%arg0: i32, %arg1: i32, %arg2: i32) -> (i32, i32) {
    %c0_i32 = arith.constant 0 : i32
    %c0_i32_0 = arith.constant 0 : i32
    return %c0_i32, %arg1 : i32, i32
  }
  func.func @transform_3(%arg0: i32, %arg1: i32, %arg2: i32) -> (i32, i32, i32) {
    %c0_i32 = arith.constant 0 : i32
    %c0_i32_0 = arith.constant 0 : i32
    return %c0_i32, %arg0, %arg1 : i32, i32, i32
  }
}

</mosaic_0001>

<llo_original>
// kernel: tpu_custom_call.1
$region0: #{tpu_custom_call.1}
  #allocation0 [shape = 'u32[]', space=smem, size = 0x4, offset = 0x4, fixed_abs, tag = 'smem constant byte address 0x4 - core index']
  #allocation1 [shape = 'u32[144,128]{1,0:T(1,128)}', space=vmem, size = 0x12000, scoped, tag = 'internal scratch']
  #allocation2 [shape = 'f32[8,2,8]{2,1,0:T(2,128)}', space=vmem, size = 0x2000, scoped, tag = 'scratch operand']
  %s0 = inlined_call_operand.vmem [shape: f32[8,2,4], index: 0, kind: input, shape index: {}]
  %s1 = inlined_call_operand.vmem [shape: f32[4,4,8], index: 1, kind: input, shape index: {}]
  %s2 = inlined_call_operand.vmem [shape: f32[1,8], index: 2, kind: input, shape index: {}]
  %s3 = inlined_call_operand.hbm [shape: f32[8,2,8], index: 3, kind: output, shape index: {}]
  %s4 = sld [smem:[#allocation0]]
  $region30: #{tpu_custom_call.1} parent=0
    _
  %s6 = ssub.s32 1, %s4
  %s7 = scalar_select 0, %s6, %s4
  $region1: #{tpu_custom_call.1} parent=0
    #allocation3 [shape = 'u8[8192]{0}', space=vmem, size = 0x2000, scoped, tag = 'output window, operand 0, single buffered']
    #allocation4 [shape = 's32[1]{0}', space=sflag, size = 0x4, scoped, tag = 'scoped memory for tpu_custom_call.1']
    %8 = vsyncpa [#allocation4], 0
    // Predicated region
    $region2: #{tpu_custom_call.1} parent=1 // pred_check
      _
    $region3: #{tpu_custom_call.1} parent=1 // pred_check_branch
      %10 = sbr.rel (0) target = $region5
    $region4: #{tpu_custom_call.1} parent=1 // pred_region
      _
    $region5: #{tpu_custom_call.1} parent=1 // pred_fallthru
      _
    // Predicated region
    $region6: #{tpu_custom_call.1} parent=1 // pred_check
      _
    $region7: #{tpu_custom_call.1} parent=1 // pred_check_branch
      %12 = sbr.rel (0) target = $region9
    $region8: #{tpu_custom_call.1} parent=1 // pred_region
      _
    $region9: #{tpu_custom_call.1} parent=1 // pred_fallthru
      _
    // Predicated region
    $region10: #{tpu_custom_call.1} parent=1 // pred_check
      _
    $region11: #{tpu_custom_call.1} parent=1 // pred_check_branch
      %14 = sbr.rel (0) target = $region13
    $region12: #{tpu_custom_call.1} parent=1 // pred_region
      _
    $region13: #{tpu_custom_call.1} parent=1 // pred_fallthru
      _
    %p15 = scmp.eq.s32.totalorder 0, 0
    // Predicated region
    $region14: #{tpu_custom_call.1} parent=1 // pred_check
      %p16 = pneg %p15
    $region15: #{tpu_custom_call.1} parent=1 // pred_check_branch
      %18 = sbr.rel (%p16) target = $region17
    $region16: #{tpu_custom_call.1} parent=1 // pred_region
      %vm19 = vcmask 58368
      %20 = vst.msk [vmem:[#allocation2] sm:$0x3] %vm19, 0.0
      %21 = vst.msk [vmem:[#allocation2 + $0x2] sm:$0x3] %vm19, 0.0
      %22 = vst.msk [vmem:[#allocation2 + $0x4] sm:$0x3] %vm19, 0.0
      %23 = vst.msk [vmem:[#allocation2 + $0x6] sm:$0x3] %vm19, 0.0
      %24 = vst.msk [vmem:[#allocation2 + $0x8] sm:$0x3] %vm19, 0.0
      %25 = vst.msk [vmem:[#allocation2 + $0xa] sm:$0x3] %vm19, 0.0
      %26 = vst.msk [vmem:[#allocation2 + $0xc] sm:$0x3] %vm19, 0.0
      %27 = vst.msk [vmem:[#allocation2 + $0xe] sm:$0x3] %vm19, 0.0
      %v28 = vld [vmem:[%s2] sm:$0x1]
      %v30 = vlaneseq
      %v31 = vshrl.u32 %v30, 7
      %v32 = vsub.s32 0, %v31
      %v33 = vrot.slane %v28, %v32
      %35 = vst.msk [vmem:[#allocation2] sm:$0x3] %vm19, %v33
    $region17: #{tpu_custom_call.1} parent=1 // pred_fallthru
      _
    %v36 = vld [vmem:[%s0] sm:$0x3]
    %v37 = vld [vmem:[%s1] sm:$0xf]
    %vm38 = vcmask 31744
    %v40 = vsel %vm38, %v36, 0
    %vm42 = vcmask 1043456
    %v44 = vsel %vm42, %v37, 0
    %46 = vmatprep.subr.mxu0 0.0
    %47 = vmatpush1.msra.mxu0 %v44
    %48 = vmatprep.subr.mxu0 0.0
    %49 = vmatpush1.msra.mxu0 0.0
    %50 = vmatprep.subr.mxu0 0.0
    %51 = vmatpush1.msra.mxu0 0.0
    %52 = vmatprep.subr.mxu0 0.0
    %53 = vmatpush1.msra.mxu0 0.0
    %54 = vmatprep.subr.mxu0 0.0
    %55 = vmatpush1.msra.mxu0 0.0
    %56 = vmatprep.subr.mxu0 0.0
    %57 = vmatpush1.msra.mxu0 0.0
    %58 = vmatprep.subr.mxu0 0.0
    %59 = vmatpush1.msra.mxu0 0.0
    %60 = vmatprep.subr.mxu0 0.0
    %61 = vmatpush1.msra.mxu0 0.0
    %62 = vmatprep.subr.mxu0 0.0
    %63 = vmatpush1.msra.mxu0 0.0
    %64 = vmatprep.subr.mxu0 0.0
    %65 = vmatpush1.msra.mxu0 0.0
    %66 = vmatprep.subr.mxu0 0.0
    %67 = vmatpush1.msra.mxu0 0.0
    %68 = vmatprep.subr.mxu0 0.0
    %69 = vmatpush1.msra.mxu0 0.0
    %70 = vmatprep.subr.mxu0 0.0
    %71 = vmatpush1.msra.mxu0 0.0
    %72 = vmatprep.subr.mxu0 0.0
    %73 = vmatpush1.msra.mxu0 0.0
    %74 = vmatprep.subr.mxu0 0.0
    %75 = vmatpush1.msra.mxu0 0.0
    %76 = vmatprep.subr.mxu0 0.0
    %77 = vmatpush1.msra.mxu0 0.0
    %78 = vmatprep.subr.mxu0 0.0
    %79 = vmatpush1.msra.mxu0 0.0
    %80 = vmatprep.subr.mxu0 0.0
    %81 = vmatpush1.msra.mxu0 0.0
    %82 = vmatprep.subr.mxu0 0.0
    %83 = vmatpush1.msra.mxu0 0.0
    %84 = vmatprep.subr.mxu0 0.0
    %85 = vmatpush1.msra.mxu0 0.0
    %86 = vmatprep.subr.mxu0 0.0
    %87 = vmatpush1.msra.mxu0 0.0
    %88 = vmatprep.subr.mxu0 0.0
    %89 = vmatpush1.msra.mxu0 0.0
    %90 = vmatprep.subr.mxu0 0.0
    %91 = vmatpush1.msra.mxu0 0.0
    %92 = vmatprep.subr.mxu0 0.0
    %93 = vmatpush1.msra.mxu0 0.0
    %94 = vmatprep.subr.mxu0 0.0
    %95 = vmatpush1.msra.mxu0 0.0
    %96 = vmatprep.subr.mxu0 0.0
    %97 = vmatpush1.msra.mxu0 0.0
    %98 = vmatprep.subr.mxu0 0.0
    %99 = vmatpush1.msra.mxu0 0.0
    %100 = vmatprep.subr.mxu0 0.0
    %101 = vmatpush1.msra.mxu0 0.0
    %102 = vmatprep.subr.mxu0 0.0
    %103 = vmatpush1.msra.mxu0 0.0
    %104 = vmatprep.subr.mxu0 0.0
    %105 = vmatpush1.msra.mxu0 0.0
    %106 = vmatprep.subr.mxu0 0.0
    %107 = vmatpush1.msra.mxu0 0.0
    %108 = vmatprep.subr.mxu0 0.0
    %109 = vmatpush1.msra.mxu0 0.0
    %110 = vmatprep.mubr.f32.mxu0 0.0
    %111 = vmatmul.mubr.f32.gmra.mrb[0].mxu0 %v40
    %v112 = vpop.f32.mrb[0].mxu0
    %v113 = vadd.f32 0.0, %v112
    %v114 = vpop.f32.mrb[0].mxu0
    %115 = vdwg.mxu0
    %v116 = vld [vmem:[#allocation2] sm:$0x3]
    %v117 = vadd.f32 %v116, %v113
    %vm118 = vcmask 58368
    %119 = vst.msk [vmem:[#allocation2] sm:$0x3] %vm118, %v117
    %s120 = scalar_lea.vmem %s0, 2
    %v121 = vld [vmem:[%s120] sm:$0x3]
    %v122 = vld [vmem:[%s120 + $0x2] sm:$0x3]
    %v123 = vld [vmem:[%s120 + $0x4] sm:$0x3]
    %s124 = scalar_lea.vmem %s1, 4
    %v125 = vld [vmem:[%s124] sm:$0xf]
    %v129 = vcombine.low %v121, %v122
    %v131 = vunpack.c.l.s4 1983009808
    %v132 = vunpack.c.0.s8 %v131
    %v133 = vlaneseq
    %v134 = vshrl.u32 %v133, 7
    %v135 = vsub.s32 %v132, %v134
    %v136 = vrot.slane %v129, %v135
    %v138 = vunpack.c.l.s4 1983009808
    %v139 = vunpack.c.0.s8 %v138
    %v140 = vlaneseq
    %v141 = vshrl.u32 %v140, 7
    %v142 = vsub.s32 %v139, %v141
    %v143 = vrot.slane %v123, %v142
    %v144 = vcombine.low %v136, %v143
    %v145 = vsel %vm38, %v144, 0
    %v148 = vsel %vm42, %v125, 0
    %150 = vmatprep.subr.mxu0 0.0
    %151 = vmatpush1.msra.mxu0 %v148
    %152 = vmatprep.subr.mxu0 0.0
    %153 = vmatpush1.msra.mxu0 0.0
    %154 = vmatprep.subr.mxu0 0.0
    %155 = vmatpush1.msra.mxu0 0.0
    %156 = vmatprep.subr.mxu0 0.0
    %157 = vmatpush1.msra.mxu0 0.0
    %158 = vmatprep.subr.mxu0 0.0
    %159 = vmatpush1.msra.mxu0 0.0
    %160 = vmatprep.subr.mxu0 0.0
    %161 = vmatpush1.msra.mxu0 0.0
    %162 = vmatprep.subr.mxu0 0.0
    %163 = vmatpush1.msra.mxu0 0.0
    %164 = vmatprep.subr.mxu0 0.0
    %165 = vmatpush1.msra.mxu0 0.0
    %166 = vmatprep.subr.mxu0 0.0
    %167 = vmatpush1.msra.mxu0 0.0
    %168 = vmatprep.subr.mxu0 0.0
    %169 = vmatpush1.msra.mxu0 0.0
    %170 = vmatprep.subr.mxu0 0.0
    %171 = vmatpush1.msra.mxu0 0.0
    %172 = vmatprep.subr.mxu0 0.0
    %173 = vmatpush1.msra.mxu0 0.0
    %174 = vmatprep.subr.mxu0 0.0
    %175 = vmatpush1.msra.mxu0 0.0
    %176 = vmatprep.subr.mxu0 0.0
    %177 = vmatpush1.msra.mxu0 0.0
    %178 = vmatprep.subr.mxu0 0.0
    %179 = vmatpush1.msra.mxu0 0.0
    %180 = vmatprep.subr.mxu0 0.0
    %181 = vmatpush1.msra.mxu0 0.0
    %182 = vmatprep.subr.mxu0 0.0
    %183 = vmatpush1.msra.mxu0 0.0
    %184 = vmatprep.subr.mxu0 0.0
    %185 = vmatpush1.msra.mxu0 0.0
    %186 = vmatprep.subr.mxu0 0.0
    %187 = vmatpush1.msra.mxu0 0.0
    %188 = vmatprep.subr.mxu0 0.0
    %189 = vmatpush1.msra.mxu0 0.0
    %190 = vmatprep.subr.mxu0 0.0
    %191 = vmatpush1.msra.mxu0 0.0
    %192 = vmatprep.subr.mxu0 0.0
    %193 = vmatpush1.msra.mxu0 0.0
    %194 = vmatprep.subr.mxu0 0.0
    %195 = vmatpush1.msra.mxu0 0.0
    %196 = vmatprep.subr.mxu0 0.0
    %197 = vmatpush1.msra.mxu0 0.0
    %198 = vmatprep.subr.mxu0 0.0
    %199 = vmatpush1.msra.mxu0 0.0
    %200 = vmatprep.subr.mxu0 0.0
    %201 = vmatpush1.msra.mxu0 0.0
    %202 = vmatprep.subr.mxu0 0.0
    %203 = vmatpush1.msra.mxu0 0.0
    %204 = vmatprep.subr.mxu0 0.0
    %205 = vmatpush1.msra.mxu0 0.0
    %206 = vmatprep.subr.mxu0 0.0
    %207 = vmatpush1.msra.mxu0 0.0
    %208 = vmatprep.subr.mxu0 0.0
    %209 = vmatpush1.msra.mxu0 0.0
    %210 = vmatprep.subr.mxu0 0.0
    %211 = vmatpush1.msra.mxu0 0.0
    %212 = vmatprep.subr.mxu0 0.0
    %213 = vmatpush1.msra.mxu0 0.0
    %214 = vmatprep.mubr.f32.mxu0 0.0
    %215 = vmatmul.mubr.f32.gmra.mrb[0].mxu0 %v145
    %v216 = vpop.f32.mrb[0].mxu0
    %v217 = vadd.f32 0.0, %v216
    %v218 = vpop.f32.mrb[0].mxu0
    %219 = vdwg.mxu0
    %s220 = scalar_lea.vmem [#allocation2], 2
    %v221 = vld [vmem:[%s220] sm:$0x3]
    %v222 = vld [vmem:[%s220 + $0x2] sm:$0x3]
    %v223 = vld [vmem:[%s220 + $0x4] sm:$0x3]
    %v225 = vcombine.high %v217, %v217
    %v227 = vunpack.c.l.s4 1983009808
    %v228 = vunpack.c.0.s8 %v227
    %v229 = vlaneseq
    %v230 = vshrl.u32 %v229, 7
    %v231 = vsub.s32 %v228, %v230
    %v232 = vrot.slane %v217, %v231
    %v234 = vunpack.c.l.s4 1983009808
    %v235 = vunpack.c.0.s8 %v234
    %v236 = vlaneseq
    %v237 = vshrl.u32 %v236, 7
    %v238 = vsub.s32 %v235, %v237
    %v239 = vrot.slane %v225, %v238
    %v240 = vcombine.high %v232, %v232
    %v244 = vadd.f32 %v221, %v232
    %v245 = vadd.f32 %v222, %v240
    %v246 = vadd.f32 %v223, %v239
    %247 = vst.msk [vmem:[%s220] sm:$0x3] %vm118, %v244
    %248 = vst.msk [vmem:[%s220 + $0x2] sm:$0x3] %vm118, %v245
    %249 = vst.msk [vmem:[%s220 + $0x4] sm:$0x3] %vm118, %v246
    %s250 = scalar_lea.vmem %s0, 8
    %v251 = vld [vmem:[%s250] sm:$0x3]
    %v252 = vld [vmem:[%s250 + $0x2] sm:$0x3]
    %v253 = vld [vmem:[%s250 + $0x4] sm:$0x3]
    %s254 = scalar_lea.vmem %s1, 8
    %v255 = vld [vmem:[%s254] sm:$0xf]
    %v259 = vcombine.low %v251, %v252
    %v261 = vunpack.c.l.s4 1983009808
    %v262 = vunpack.c.0.s8 %v261
    %v263 = vlaneseq
    %v264 = vshrl.u32 %v263, 7
    %v265 = vsub.s32 %v262, %v264
    %v266 = vrot.slane %v259, %v265
    %v268 = vunpack.c.l.s4 1983009808
    %v269 = vunpack.c.0.s8 %v268
    %v270 = vlaneseq
    %v271 = vshrl.u32 %v270, 7
    %v272 = vsub.s32 %v269, %v271
    %v273 = vrot.slane %v253, %v272
    %v274 = vcombine.low %v266, %v273
    %v275 = vsel %vm38, %v274, 0
    %v278 = vsel %vm42, %v255, 0
    %280 = vmatprep.subr.mxu0 0.0
    %281 = vmatpush1.msra.mxu0 %v278
    %282 = vmatprep.subr.mxu0 0.0
    %283 = vmatpush1.msra.mxu0 0.0
    %284 = vmatprep.subr.mxu0 0.0
    %285 = vmatpush1.msra.mxu0 0.0
    %286 = vmatprep.subr.mxu0 0.0
    %287 = vmatpush1.msra.mxu0 0.0
    %288 = vmatprep.subr.mxu0 0.0
    %289 = vmatpush1.msra.mxu0 0.0
    %290 = vmatprep.subr.mxu0 0.0
    %291 = vmatpush1.msra.mxu0 0.0
    %292 = vmatprep.subr.mxu0 0.0
    %293 = vmatpush1.msra.mxu0 0.0
    %294 = vmatprep.subr.mxu0 0.0
    %295 = vmatpush1.msra.mxu0 0.0
    %296 = vmatprep.subr.mxu0 0.0
    %297 = vmatpush1.msra.mxu0 0.0
    %298 = vmatprep.subr.mxu0 0.0
    %299 = vmatpush1.msra.mxu0 0.0
    %300 = vmatprep.subr.mxu0 0.0
    %301 = vmatpush1.msra.mxu0 0.0
    %302 = vmatprep.subr.mxu0 0.0
    %303 = vmatpush1.msra.mxu0 0.0
    %304 = vmatprep.subr.mxu0 0.0
    %305 = vmatpush1.msra.mxu0 0.0
    %306 = vmatprep.subr.mxu0 0.0
    %307 = vmatpush1.msra.mxu0 0.0
    %308 = vmatprep.subr.mxu0 0.0
    %309 = vmatpush1.msra.mxu0 0.0
    %310 = vmatprep.subr.mxu0 0.0
    %311 = vmatpush1.msra.mxu0 0.0
    %312 = vmatprep.subr.mxu0 0.0
    %313 = vmatpush1.msra.mxu0 0.0
    %314 = vmatprep.subr.mxu0 0.0
    %315 = vmatpush1.msra.mxu0 0.0
    %316 = vmatprep.subr.mxu0 0.0
    %317 = vmatpush1.msra.mxu0 0.0
    %318 = vmatprep.subr.mxu0 0.0
    %319 = vmatpush1.msra.mxu0 0.0
    %320 = vmatprep.subr.mxu0 0.0
    %321 = vmatpush1.msra.mxu0 0.0
    %322 = vmatprep.subr.mxu0 0.0
    %323 = vmatpush1.msra.mxu0 0.0
    %324 = vmatprep.subr.mxu0 0.0
    %325 = vmatpush1.msra.mxu0 0.0
    %326 = vmatprep.subr.mxu0 0.0
    %327 = vmatpush1.msra.mxu0 0.0
    %328 = vmatprep.subr.mxu0 0.0
    %329 = vmatpush1.msra.mxu0 0.0
    %330 = vmatprep.subr.mxu0 0.0
    %331 = vmatpush1.msra.mxu0 0.0
    %332 = vmatprep.subr.mxu0 0.0
    %333 = vmatpush1.msra.mxu0 0.0
    %334 = vmatprep.subr.mxu0 0.0
    %335 = vmatpush1.msra.mxu0 0.0
    %336 = vmatprep.subr.mxu0 0.0
    %337 = vmatpush1.msra.mxu0 0.0
    %338 = vmatprep.subr.mxu0 0.0
    %339 = vmatpush1.msra.mxu0 0.0
    %340 = vmatprep.subr.mxu0 0.0
    %341 = vmatpush1.msra.mxu0 0.0
    %342 = vmatprep.subr.mxu0 0.0
    %343 = vmatpush1.msra.mxu0 0.0
    %344 = vmatprep.mubr.f32.mxu0 0.0
    %345 = vmatmul.mubr.f32.gmra.mrb[0].mxu0 %v275
    %v346 = vpop.f32.mrb[0].mxu0
    %v347 = vadd.f32 0.0, %v346
    %v348 = vpop.f32.mrb[0].mxu0
    %349 = vdwg.mxu0
    %s350 = scalar_lea.vmem [#allocation2], 8
    %v351 = vld [vmem:[%s350] sm:$0x3]
    %v352 = vld [vmem:[%s350 + $0x2] sm:$0x3]
    %v353 = vld [vmem:[%s350 + $0x4] sm:$0x3]
    %v355 = vcombine.high %v347, %v347
    %v357 = vunpack.c.l.s4 1983009808
    %v358 = vunpack.c.0.s8 %v357
    %v359 = vlaneseq
    %v360 = vshrl.u32 %v359, 7
    %v361 = vsub.s32 %v358, %v360
    %v362 = vrot.slane %v347, %v361
    %v364 = vunpack.c.l.s4 1983009808
    %v365 = vunpack.c.0.s8 %v364
    %v366 = vlaneseq
    %v367 = vshrl.u32 %v366, 7
    %v368 = vsub.s32 %v365, %v367
    %v369 = vrot.slane %v355, %v368
    %v370 = vcombine.high %v362, %v362
    %v374 = vadd.f32 %v351, %v362
    %v375 = vadd.f32 %v352, %v370
    %v376 = vadd.f32 %v353, %v369
    %377 = vst.msk [vmem:[%s350] sm:$0x3] %vm118, %v374
    %378 = vst.msk [vmem:[%s350 + $0x2] sm:$0x3] %vm118, %v375
    %379 = vst.msk [vmem:[%s350 + $0x4] sm:$0x3] %vm118, %v376
    %s380 = scalar_lea.vmem %s0, 14
    %v381 = vld [vmem:[%s380] sm:$0x3]
    %s382 = scalar_lea.vmem %s1, 12
    %v383 = vld [vmem:[%s382] sm:$0xf]
    %v385 = vsel %vm38, %v381, 0
    %v388 = vsel %vm42, %v383, 0
    %390 = vmatprep.subr.mxu0 0.0
    %391 = vmatpush1.msra.mxu0 %v388
    %392 = vmatprep.subr.mxu0 0.0
    %393 = vmatpush1.msra.mxu0 0.0
    %394 = vmatprep.subr.mxu0 0.0
    %395 = vmatpush1.msra.mxu0 0.0
    %396 = vmatprep.subr.mxu0 0.0
    %397 = vmatpush1.msra.mxu0 0.0
    %398 = vmatprep.subr.mxu0 0.0
    %399 = vmatpush1.msra.mxu0 0.0
    %400 = vmatprep.subr.mxu0 0.0
    %401 = vmatpush1.msra.mxu0 0.0
    %402 = vmatprep.subr.mxu0 0.0
    %403 = vmatpush1.msra.mxu0 0.0
    %404 = vmatprep.subr.mxu0 0.0
    %405 = vmatpush1.msra.mxu0 0.0
    %406 = vmatprep.subr.mxu0 0.0
    %407 = vmatpush1.msra.mxu0 0.0
    %408 = vmatprep.subr.mxu0 0.0
    %409 = vmatpush1.msra.mxu0 0.0
    %410 = vmatprep.subr.mxu0 0.0
    %411 = vmatpush1.msra.mxu0 0.0
    %412 = vmatprep.subr.mxu0 0.0
    %413 = vmatpush1.msra.mxu0 0.0
    %414 = vmatprep.subr.mxu0 0.0
    %415 = vmatpush1.msra.mxu0 0.0
    %416 = vmatprep.subr.mxu0 0.0
    %417 = vmatpush1.msra.mxu0 0.0
    %418 = vmatprep.subr.mxu0 0.0
    %419 = vmatpush1.msra.mxu0 0.0
    %420 = vmatprep.subr.mxu0 0.0
    %421 = vmatpush1.msra.mxu0 0.0
    %422 = vmatprep.subr.mxu0 0.0
    %423 = vmatpush1.msra.mxu0 0.0
    %424 = vmatprep.subr.mxu0 0.0
    %425 = vmatpush1.msra.mxu0 0.0
    %426 = vmatprep.subr.mxu0 0.0
    %427 = vmatpush1.msra.mxu0 0.0
    %428 = vmatprep.subr.mxu0 0.0
    %429 = vmatpush1.msra.mxu0 0.0
    %430 = vmatprep.subr.mxu0 0.0
    %431 = vmatpush1.msra.mxu0 0.0
    %432 = vmatprep.subr.mxu0 0.0
    %433 = vmatpush1.msra.mxu0 0.0
    %434 = vmatprep.subr.mxu0 0.0
    %435 = vmatpush1.msra.mxu0 0.0
    %436 = vmatprep.subr.mxu0 0.0
    %437 = vmatpush1.msra.mxu0 0.0
    %438 = vmatprep.subr.mxu0 0.0
    %439 = vmatpush1.msra.mxu0 0.0
    %440 = vmatprep.subr.mxu0 0.0
    %441 = vmatpush1.msra.mxu0 0.0
    %442 = vmatprep.subr.mxu0 0.0
    %443 = vmatpush1.msra.mxu0 0.0
    %444 = vmatprep.subr.mxu0 0.0
    %445 = vmatpush1.msra.mxu0 0.0
    %446 = vmatprep.subr.mxu0 0.0
    %447 = vmatpush1.msra.mxu0 0.0
    %448 = vmatprep.subr.mxu0 0.0
    %449 = vmatpush1.msra.mxu0 0.0
    %450 = vmatprep.subr.mxu0 0.0
    %451 = vmatpush1.msra.mxu0 0.0
    %452 = vmatprep.subr.mxu0 0.0
    %453 = vmatpush1.msra.mxu0 0.0
    %454 = vmatprep.mubr.f32.mxu0 0.0
    %455 = vmatmul.mubr.f32.gmra.mrb[0].mxu0 %v385
    %v456 = vpop.f32.mrb[0].mxu0
    %v457 = vadd.f32 0.0, %v456
    %v458 = vpop.f32.mrb[0].mxu0
    %459 = vdwg.mxu0
    %s460 = scalar_lea.vmem [#allocation2], 14
    %v461 = vld [vmem:[%s460] sm:$0x3]
    %v462 = vadd.f32 %v461, %v457
    %463 = vst.msk [vmem:[%s460] sm:$0x3] %vm118, %v462
    // Predicated region
    $region18: #{tpu_custom_call.1} parent=1 // pred_check
      %p464 = pneg %p15
    $region19: #{tpu_custom_call.1} parent=1 // pred_check_branch
      %466 = sbr.rel (%p464) target = $region21
    $region20: #{tpu_custom_call.1} parent=1 // pred_region
      %v467 = vld [vmem:[#allocation2] sm:$0x3]
      %v468 = vld [vmem:[#allocation2 + $0x2] sm:$0x3]
      %v469 = vld [vmem:[#allocation2 + $0x4] sm:$0x3]
      %v470 = vld [vmem:[#allocation2 + $0x6] sm:$0x3]
      %v471 = vld [vmem:[#allocation2 + $0x8] sm:$0x3]
      %v472 = vld [vmem:[#allocation2 + $0xa] sm:$0x3]
      %v473 = vld [vmem:[#allocation2 + $0xc] sm:$0x3]
      %v474 = vld [vmem:[#allocation2 + $0xe] sm:$0x3]
      %475 = vst.msk [vmem:[#allocation3] sm:$0x3] %vm118, %v467
      %476 = vst.msk [vmem:[#allocation3 + $0x2] sm:$0x3] %vm118, %v468
      %477 = vst.msk [vmem:[#allocation3 + $0x4] sm:$0x3] %vm118, %v469
      %478 = vst.msk [vmem:[#allocation3 + $0x6] sm:$0x3] %vm118, %v470
      %479 = vst.msk [vmem:[#allocation3 + $0x8] sm:$0x3] %vm118, %v471
      %480 = vst.msk [vmem:[#allocation3 + $0xa] sm:$0x3] %vm118, %v472
      %481 = vst.msk [vmem:[#allocation3 + $0xc] sm:$0x3] %vm118, %v473
      %482 = vst.msk [vmem:[#allocation3 + $0xe] sm:$0x3] %vm118, %v474
    $region21: #{tpu_custom_call.1} parent=1 // pred_fallthru
      _
    // Predicated region
    $region22: #{tpu_custom_call.1} parent=1 // pred_check
      _
    $region23: #{tpu_custom_call.1} parent=1 // pred_check_branch
      %484 = sbr.rel (0) target = $region25
    $region24: #{tpu_custom_call.1} parent=1 // pred_region
      %s486 = ssub.s32 256, 256
      %487 = vsyncadd [#allocation4], %s486
      %s488 = sshll.u32 [#allocation3], 4
      %s489 = int_to_ptr.vmem [resolvable:$true] %s488
      %494 = dma.vmem_to_hbm [thread:$0]  %s489, 256, %s3, [#allocation4], 32, 32, 2
    $region25: #{tpu_custom_call.1} parent=1 // pred_fallthru
      _
    // Predicated region
    $region26: #{tpu_custom_call.1} parent=1 // pred_check
      _
    $region27: #{tpu_custom_call.1} parent=1 // pred_check_branch
      %496 = sbr.rel (0) target = $region29
    $region28: #{tpu_custom_call.1} parent=1 // pred_region
      %497 = dma.done [#allocation4], 256
    $region29: #{tpu_custom_call.1} parent=1 // pred_fallthru
      _
    %498 = vsyncpa [#allocation4], 1

</llo_original>
